<compile_context>
chip_gen: v5e
topology: v5e:2x2
jax: 0.10.0
libtpu: 0.0.40
codegen_flags: <defaults>
</compile_context>

<pallas_src>
import functools

import jax
import jax.numpy as jnp
from jax.experimental import pallas as pl
from jax.experimental.pallas import tpu as pltpu

_LANE = 128
_SUBLANE = 8


def _round_up(v: int, m: int) -> int:
    return ((v + m - 1) // m) * m


def _vmem_budgets():
    """Returns (vmem_limit_bytes, per-block byte budget), chip-aware.

    The per-block budget is interpreted against the *full* per-element VMEM
    cost (double-buffered in + out and in-kernel f32 temporaries), so it is a
    real upper bound, not just the raw block size.
    """
    try:
        cap = pltpu.get_tpu_info().vmem_capacity_bytes
    except Exception:
        cap = 64 * 1024 * 1024  # assume the smallest (v7x per-TensorCore)
    if cap >= 96 * 1024 * 1024:           # v5e / v6e: 128 MiB physical VMEM
        return 80 * 1024 * 1024, 40 * 1024 * 1024
    return 48 * 1024 * 1024, 24 * 1024 * 1024   # v7x: 64 MiB per TC


# ---------------- one-pass kernel: N fully resident in each block ------------


def _softmax_dim0_kernel(x_ref, o_ref):
    # (N, TILE_D) tile in VMEM; compute in f32 (v5e has no bf16 VPU/EUP).
    x = x_ref[...].astype(jnp.float32)
    e = jnp.exp(x)                              # EUP transcendental
    s = jnp.sum(e, axis=0, keepdims=True)       # XLU cross-sublane reduce -> (1, TILE_D)
    # D-wide approx reciprocal (EUP slot) + one Newton-Raphson refinement for
    # full f32 accuracy, then a broadcast VPU multiply (keeps the N*D divide
    # off the exp-busy EUP).
    inv = pl.reciprocal(s, approx=True)
    inv = inv * (2.0 - s * inv)
    o_ref[...] = (e * inv).astype(o_ref.dtype)


# ---------------- two-pass fallback for large N -------------------------------


def _colsum_exp_kernel(x_ref, s_ref, *, n_rows, tile_n, mask_rows):
    # grid = (D blocks [parallel], N blocks [arbitrary, last]).
    k = pl.program_id(1)

    @pl.when(k == 0)
    def _():
        s_ref[...] = jnp.zeros_like(s_ref)

    x = x_ref[...].astype(jnp.float32)
    e = jnp.exp(x)
    if mask_rows:
        # Partial final N block: out-of-bounds rows hold unspecified data and
        # must not contribute to the column sums.
        row = jax.lax.broadcasted_iota(jnp.int32, x.shape, 0) + k * tile_n
        e = jnp.where(row < n_rows, e, 0.0)
    s_ref[...] += jnp.sum(e, axis=0, keepdims=True)


def _normalize_kernel(x_ref, s_ref, o_ref):
    x = x_ref[...].astype(jnp.float32)
    e = jnp.exp(x)
    s = s_ref[...]
    inv = pl.reciprocal(s, approx=True)
    inv = inv * (2.0 - s * inv)
    o_ref[...] = (e * inv).astype(o_ref.dtype)


# ---------------- wrapper ------------------------------------------------------


@functools.partial(jax.jit, static_argnames=("tile_d", "tile_n", "force_two_pass"))
def my_softmax(x: jax.Array, *, tile_d: int | None = None,
               tile_n: int | None = None, force_two_pass: bool = False) -> jax.Array:
    """Softmax over dim=0 of `x` (any rank >= 1), matching MySoftmax.forward."""
    orig_shape = x.shape
    n = orig_shape[0]
    x2 = x.reshape(n, -1)                 # trailing dims -> one lane-dense axis
    d = x2.shape[1]

    vmem_limit, tile_budget = _vmem_budgets()
    itemsize = x2.dtype.itemsize
    # VMEM bytes per block element: double-buffered input + double-buffered
    # output + ~8 B for the full-tile f32 temporaries (x upcast and e).
    bytes_per_elem = 2 * itemsize + 2 * itemsize + 8

    d_lane = _round_up(d, _LANE)
    if tile_d is not None:
        tile_d = max(_LANE, _round_up(tile_d, _LANE))

    # Largest lane-multiple tile_d for which an (n, tile_d) block fits the budget.
    max_tile_d = ((tile_budget // bytes_per_elem) // max(n, 1)) // _LANE * _LANE
    one_pass_fits = max_tile_d >= _LANE

    if one_pass_fits and not force_two_pass:
        if tile_d is None:
            td = min(max_tile_d, d_lane)
            # Guarantee >= 2 grid steps whenever there is more than one lane
            # tile, so the "parallel" D axis shards across v7x's two TCs.
            if d_lane > _LANE:
                td = min(td, max(_LANE, _round_up(pl.cdiv(d, 2), _LANE)))
        else:
            td = tile_d
        grid_d = pl.cdiv(d, td)
        out = pl.pallas_call(
            _softmax_dim0_kernel,
            out_shape=jax.ShapeDtypeStruct((n, d), x2.dtype),
            grid=(grid_d,),
            in_specs=[pl.BlockSpec((n, td), lambda j: (0, j))],
            out_specs=pl.BlockSpec((n, td), lambda j: (0, j)),
            compiler_params=pltpu.CompilerParams(
                dimension_semantics=("parallel",),
                vmem_limit_bytes=vmem_limit,
            ),
        )(x2)
        return out.reshape(orig_shape)

    # -------- two-pass fallback: N tiled, per-column sums accumulated ----------
    td = tile_d if tile_d is not None else min(512, d_lane)
    if tile_n is None:
        tn = ((tile_budget // bytes_per_elem) // td) // _SUBLANE * _SUBLANE
        tn = max(_SUBLANE, tn)
    else:
        tn = max(_SUBLANE, _round_up(tile_n, _SUBLANE))
    tn = min(tn, _round_up(n, _SUBLANE))
    grid_d = pl.cdiv(d, td)
    grid_n = pl.cdiv(n, tn)
    mask_rows = (n % tn) != 0

    # Pass 1: per-column sum of exp, accumulated in the VMEM-resident (1, td)
    # output block across the (last, "arbitrary") N axis.
    sums = pl.pallas_call(
        functools.partial(_colsum_exp_kernel, n_rows=n, tile_n=tn, mask_rows=mask_rows),
        out_shape=jax.ShapeDtypeStruct((1, d), jnp.float32),
        grid=(grid_d, grid_n),
        in_specs=[pl.BlockSpec((tn, td), lambda j, k: (k, j))],
        out_specs=pl.BlockSpec((1, td), lambda j, k: (0, j)),
        compiler_params=pltpu.CompilerParams(
            dimension_semantics=("parallel", "arbitrary"),
            vmem_limit_bytes=vmem_limit,
        ),
    )(x2)

    # Pass 2: recompute exp and normalize (fully parallel grid).
    out = pl.pallas_call(
        _normalize_kernel,
        out_shape=jax.ShapeDtypeStruct((n, d), x2.dtype),
        grid=(grid_d, grid_n),
        in_specs=[pl.BlockSpec((tn, td), lambda j, k: (k, j)),
                  pl.BlockSpec((1, td), lambda j, k: (0, j))],
        out_specs=pl.BlockSpec((tn, td), lambda j, k: (k, j)),
        compiler_params=pltpu.CompilerParams(
            dimension_semantics=("parallel", "parallel"),
            vmem_limit_bytes=vmem_limit,
        ),
    )(x2, sums)
    return out.reshape(orig_shape)


def _ref_softmax_dim0(x):
    e = jnp.exp(x.astype(jnp.float32))
    return e / jnp.sum(e, axis=0)


if __name__ == "__main__":
    key = jax.random.PRNGKey(0)

    # 1) Small shape implied by the module: seq=8, hidden=32.
    x = jax.random.normal(key, (8, 32), dtype=jnp.float32)
    out = jax.block_until_ready(my_softmax(x))
    ref = _ref_softmax_dim0(x)
    assert out.shape == x.shape
    assert jnp.allclose(out, ref, atol=1e-5, rtol=1e-5)
    assert jnp.allclose(jnp.sum(out, axis=0), jnp.ones((32,)), atol=1e-4)

    # 2) Non-multiple-of-128 width + forced multi-tile grid (exercises the
    #    no-pad partial final block and the "parallel" D-axis grid).
    y = jax.random.normal(jax.random.PRNGKey(1), (32, 300), dtype=jnp.float32)
    out2 = jax.block_until_ready(my_softmax(y, tile_d=128))
    ref2 = _ref_softmax_dim0(y)
    assert out2.shape == y.shape
    assert jnp.allclose(out2, ref2, atol=1e-5, rtol=1e-5)

    # 3) bf16 I/O with f32 compute inside the kernel (v5e-safe path); the
    #    auto tile_d cap forces >= 2 grid steps here.
    z = jax.random.normal(jax.random.PRNGKey(2), (16, 256), dtype=jnp.bfloat16)
    out3 = jax.block_until_ready(my_softmax(z))
    ref3 = _ref_softmax_dim0(z)
    assert out3.dtype == z.dtype
    assert jnp.allclose(out3.astype(jnp.float32), ref3, atol=2e-2, rtol=2e-2)

    # 4) Two-pass large-N fallback, forced at a small shape (exercises the
    #    N-axis accumulation, pl.when init, and the partial-N row mask).
    w = jax.random.normal(jax.random.PRNGKey(3), (40, 200), dtype=jnp.float32)
    out4 = jax.block_until_ready(my_softmax(w, tile_d=128, tile_n=16,
                                            force_two_pass=True))
    ref4 = _ref_softmax_dim0(w)
    assert out4.shape == w.shape
    assert jnp.allclose(out4, ref4, atol=1e-5, rtol=1e-5)

    # 5) Higher-rank input: softmax over dim 0 with broadcast over trailing dims.
    v = jax.random.normal(jax.random.PRNGKey(4), (4, 3, 10), dtype=jnp.float32)
    out5 = jax.block_until_ready(my_softmax(v))
    ref5 = _ref_softmax_dim0(v)
    assert out5.shape == v.shape
    assert jnp.allclose(out5, ref5, atol=1e-5, rtol=1e-5)

    print("KERNEL_OK")
</pallas_src>

<mosaic_0001>
module attributes {stable_mosaic.version = 11 : i64} {
  func.func @_softmax_dim0_kernel(%arg0: i32, %arg1: memref<8x128xf32, #tpu.memory_space<vmem>>, %arg2: memref<8x128xf32, #tpu.memory_space<vmem>>) attributes {dimension_semantics = [#tpu.dimension_semantics<parallel>], iteration_bounds = array<i64: 1>, scalar_prefetch = 0 : i64, scratch_operands = 0 : i64, tpu.core_type = #tpu.core_type<tc>, window_params = [{transform_indices = @transform_0, window_bounds = array<i64: 8, 128>}, {transform_indices = @transform_1, window_bounds = array<i64: 8, 128>}]} {
    %c0 = arith.constant 0 : index
    %c0_0 = arith.constant 0 : index
    %0 = vector.load %arg1[%c0, %c0_0] : memref<8x128xf32, #tpu.memory_space<vmem>>, vector<8x128xf32>
    %1 = math.exp %0 : vector<8x128xf32>
    %cst = arith.constant dense<0.000000e+00> : vector<128xf32>
    %2 = vector.multi_reduction <add>, %1, %cst [0] : vector<8x128xf32> to vector<128xf32>
    %3 = vector.shape_cast %2 : vector<128xf32> to vector<1x128xf32>
    %4 = tpu.reciprocal %3 {approx = true} : vector<1x128xf32> -> vector<1x128xf32>
    %5 = arith.mulf %3, %4 : vector<1x128xf32>
    %cst_1 = arith.constant 2.000000e+00 : f32
    %6 = vector.broadcast %cst_1 : f32 to vector<1x128xf32>
    %7 = arith.subf %6, %5 : vector<1x128xf32>
    %8 = arith.mulf %4, %7 : vector<1x128xf32>
    %9 = vector.broadcast %8 : vector<1x128xf32> to vector<8x128xf32>
    %10 = arith.mulf %1, %9 : vector<8x128xf32>
    %c0_2 = arith.constant 0 : index
    %c0_3 = arith.constant 0 : index
    %11 = vector.load %arg2[%c0_2, %c0_3] : memref<8x128xf32, #tpu.memory_space<vmem>>, vector<8x128xf32>
    tpu.vector_store %arg2[%c0_2, %c0_3], %10 {strides = array<i32>} : memref<8x128xf32, #tpu.memory_space<vmem>>, vector<8x128xf32>,
    return
  }
  func.func @transform_0(%arg0: i32) -> (i32, i32) {
    %c0_i32 = arith.constant 0 : i32
    %c0_i32_0 = arith.constant 0 : i32
    return %c0_i32, %arg0 : i32, i32
  }
  func.func @transform_1(%arg0: i32) -> (i32, i32) {
    %c0_i32 = arith.constant 0 : i32
    %c0_i32_0 = arith.constant 0 : i32
    return %c0_i32, %arg0 : i32, i32
  }
}

</mosaic_0001>

<llo_original>
// kernel: my_softmax.1
$region0: #{my_softmax.1}
  #allocation0 [shape = 'u32[]', space=smem, size = 0x4, offset = 0x4, fixed_abs, tag = 'smem constant byte address 0x4 - core index']
  #allocation1 [shape = 'u32[72,128]{1,0:T(1,128)}', space=vmem, size = 0x9000, scoped, tag = 'internal scratch']
  %s0 = inlined_call_operand.hbm [shape: f32[8,32], index: 0, kind: input, shape index: {}]
  %s1 = inlined_call_operand.hbm [shape: f32[8,32], index: 1, kind: output, shape index: {}]
  %s2 = sld [smem:[#allocation0]]
  $region18: #{my_softmax.1} parent=0
    _
  %s4 = ssub.s32 1, %s2
  %s5 = scalar_select 0, %s4, %s2
  $region1: #{my_softmax.1} parent=0
    #allocation2 [shape = 'u8[4096]{0}', space=vmem, size = 0x1000, scoped, tag = 'input window, operand 0, single buffered']
    #allocation3 [shape = 's32[1]{0}', space=sflag, size = 0x4, scoped, tag = 'scoped memory for my_softmax.1']
    #allocation4 [shape = 's32[1]{0}', space=sflag, size = 0x4, scoped, tag = 'scoped memory for my_softmax.1']
    #allocation5 [shape = 'u8[4096]{0}', space=vmem, size = 0x1000, scoped, tag = 'output window, operand 0, single buffered']
    %6 = vsyncpa [#allocation3], 0
    %7 = vsyncpa [#allocation4], 0
    // Predicated region
    $region2: #{my_softmax.1} parent=1 // pred_check
      _
    $region3: #{my_softmax.1} parent=1 // pred_check_branch
      %9 = sbr.rel (0) target = $region5
    $region4: #{my_softmax.1} parent=1 // pred_region
      %11 = vsyncadd [#allocation3], 0
      %s13 = sshll.u32 %s0, 4
      %s14 = int_to_ptr.hbm [resolvable:$true] %s13
      %s15 = sshll.u32 [#allocation2], 4
      %s16 = int_to_ptr.vmem [resolvable:$true] %s15
      %18 = dma.hbm_to_vmem [thread:$0]  %s14, 128, %s16, [#allocation3]
    $region5: #{my_softmax.1} parent=1 // pred_fallthru
      _
    // Predicated region
    $region6: #{my_softmax.1} parent=1 // pred_check
      _
    $region7: #{my_softmax.1} parent=1 // pred_check_branch
      %20 = sbr.rel (0) target = $region9
    $region8: #{my_softmax.1} parent=1 // pred_region
      %22 = dma.done [#allocation3], 128
    $region9: #{my_softmax.1} parent=1 // pred_fallthru
      _
    %v23 = vld [vmem:[#allocation2] sm:$0xff]
    %v24 = vmul.f32 %v23, 1.442695
    %v25 = vpow.pop %v24
    %v26 = vrot.slane %v25, 4
    %v27 = vadd.f32 %v25, %v26
    %v28 = vrot.slane %v27, 2
    %v29 = vadd.f32 %v27, %v28
    %v30 = vrot.slane %v29, 1
    %v31 = vadd.f32 %v29, %v30
    %v32 = vrcp.pop %v31
    %v33 = vmul.f32 %v31, %v32
    %v34 = vsub.f32 2.0, %v33
    %v35 = vmul.f32 %v32, %v34
    %v36 = vmul.f32 %v25, %v35
    %37 = vst [vmem:[#allocation5] sm:$0xff] %v36
    // Predicated region
    $region10: #{my_softmax.1} parent=1 // pred_check
      _
    $region11: #{my_softmax.1} parent=1 // pred_check_branch
      %39 = sbr.rel (0) target = $region13
    $region12: #{my_softmax.1} parent=1 // pred_region
      %41 = vsyncadd [#allocation4], 0
      %s43 = sshll.u32 [#allocation5], 4
      %s44 = int_to_ptr.vmem [resolvable:$true] %s43
      %s45 = sshll.u32 %s1, 4
      %s46 = int_to_ptr.hbm [resolvable:$true] %s45
      %48 = dma.vmem_to_hbm [thread:$0]  %s44, 128, %s46, [#allocation4]
    $region13: #{my_softmax.1} parent=1 // pred_fallthru
      _
    // Predicated region
    $region14: #{my_softmax.1} parent=1 // pred_check
      _
    $region15: #{my_softmax.1} parent=1 // pred_check_branch
      %50 = sbr.rel (0) target = $region17
    $region16: #{my_softmax.1} parent=1 // pred_region
      %52 = dma.done [#allocation4], 128
    $region17: #{my_softmax.1} parent=1 // pred_fallthru
      _
    %53 = vsyncpa [#allocation3], 1
    %54 = vsyncpa [#allocation4], 1

</llo_original>
